<compile_context>
chip_gen: v7x
topology: tpu7x:2x2x1
jax: 0.10.0
libtpu: 0.0.40
codegen_flags: <defaults>
</compile_context>

<pallas_src>
import jax
import jax.numpy as jnp
from jax.experimental import pallas as pl
from jax.experimental.pallas import tpu as pltpu


def rope_kernel(x_ref, cos_ref, sin_ref, out_ref):
    """out = x * cos + rotate_pairs(x) * sin on a (TB, TL) lane-dense tile."""
    x = x_ref[...]          # (TB, TL) float32
    c = cos_ref[...]        # (1,  TL) float32, broadcast over rows (batch)
    s = sin_ref[...]        # (1,  TL) float32
    tl = x.shape[-1]        # static tile width (even, >= 2)

    # Neighbour lanes via XLU rolls; shifts must be non-negative, so the
    # "+1 neighbour" roll is expressed as tl - 1 (== -1 mod tl).
    x_next = pltpu.roll(x, shift=tl - 1, axis=1)   # x_next[:, j] = x[:, (j+1) % tl]
    x_prev = pltpu.roll(x, shift=1, axis=1)        # x_prev[:, j] = x[:, (j-1) % tl]

    # Parity mask built once per invocation (shape-constant), bitwise-and not mod.
    lane = jax.lax.broadcasted_iota(jnp.int32, x.shape, 1)
    is_even = (lane & 1) == 0
    rotated = jnp.where(is_even, -x_next, x_prev)

    out_ref[...] = x * c + rotated * s


def _pick_tile(total, target, align):
    """Largest multiple of `align` that evenly divides `total` and is <= target.

    Falls back to the full extent (always a legal BlockSpec block) otherwise.
    """
    if total <= target:
        return total
    t = (target // align) * align
    while t >= align:
        if total % t == 0:
            return t
        t -= align
    return total


def rotary_positional_embedding(desc0, pos_emb, *,
                                lane_tile_target=2048,
                                row_tile_target=256):
    """desc0: (B, H, N, D) float32; pos_emb: (1, H, N, D//2) float32."""
    B, H, N, D = desc0.shape
    if D % 2 != 0:
        raise ValueError("feature_dim must be even for rotary embedding")
    assert pos_emb.shape == (1, H, N, D // 2)

    L = H * N * D

    # Batch-invariant angle prep done once (not per grid step / per batch row):
    # cos/sin on the half-width angles, then nearest-x2 upsample (pair repeat)
    # and flatten to a lane-dense (1, L) operand.  Contiguous reshapes are free.
    cos_t = jnp.repeat(jnp.cos(pos_emb), 2, axis=-1).reshape(1, L)
    sin_t = jnp.repeat(jnp.sin(pos_emb), 2, axis=-1).reshape(1, L)
    x2d = desc0.reshape(B, L)

    # Tiles: lane tile is a multiple of 128 (or full L); row tile a multiple of
    # 8 (or full B).  ~2 MiB per (TB, TL) f32 block keeps double-buffering of
    # x/out/cos/sin comfortably inside v7x's smaller VMEM as well.
    TL = _pick_tile(L, lane_tile_target, 128)
    TB = _pick_tile(B, row_tile_target, 8)
    grid = (L // TL, B // TB)   # batch innermost -> cos/sin blocks are reused

    out2d = pl.pallas_call(
        rope_kernel,
        out_shape=jax.ShapeDtypeStruct((B, L), desc0.dtype),
        grid=grid,
        in_specs=[
            pl.BlockSpec((TB, TL), lambda l, b: (b, l)),   # desc0 rows
            pl.BlockSpec((1, TL), lambda l, b: (0, l)),    # cos (batch-broadcast)
            pl.BlockSpec((1, TL), lambda l, b: (0, l)),    # sin (batch-broadcast)
        ],
        out_specs=pl.BlockSpec((TB, TL), lambda l, b: (b, l)),
        compiler_params=pltpu.CompilerParams(
            # lane-tile axis parallel (shards across v7x's 2 TensorCores);
            # batch axis sequential so the broadcast cos/sin DMA is skipped.
            dimension_semantics=("parallel", "arbitrary"),
            vmem_limit_bytes=32 * 1024 * 1024,
        ),
    )(x2d, cos_t, sin_t)

    return out2d.reshape(B, H, N, D)


def rotary_reference(desc0, pos_emb):
    """Pure-JAX reference mirroring the PyTorch forward exactly."""
    B, H, N, D = desc0.shape
    x2 = desc0.reshape(B, H, N, D // 2, 2)
    rot = jnp.concatenate([-x2[..., 1:2], x2[..., 0:1]], axis=-1).reshape(B, H, N, D)
    theta = jnp.repeat(pos_emb, 2, axis=-1)
    return desc0 * jnp.cos(theta) + rot * jnp.sin(theta)


if __name__ == "__main__":
    B, H, N, D = 2, 4, 16, 32   # batch, num_heads, num_points, feature_dim
    key = jax.random.PRNGKey(0)
    k1, k2 = jax.random.split(key)
    desc0 = jax.random.normal(k1, (B, H, N, D), dtype=jnp.float32)
    pos_emb = jax.random.normal(k2, (1, H, N, D // 2), dtype=jnp.float32)

    out = rotary_positional_embedding(desc0, pos_emb)
    out = jax.block_until_ready(out)

    ref = rotary_reference(desc0, pos_emb)
    assert out.shape == (B, H, N, D) and out.dtype == desc0.dtype
    assert jnp.allclose(out, ref, atol=1e-5, rtol=1e-5), "Pallas output mismatch vs reference"
    print("KERNEL_OK")
</pallas_src>

<mosaic_0001>
module attributes {stable_mosaic.version = 11 : i64} {
  func.func @rope_kernel(%arg0: i32, %arg1: i32, %arg2: memref<2x2048xf32, #tpu.memory_space<vmem>>, %arg3: memref<1x2048xf32, #tpu.memory_space<vmem>>, %arg4: memref<1x2048xf32, #tpu.memory_space<vmem>>, %arg5: memref<2x2048xf32, #tpu.memory_space<vmem>>) attributes {dimension_semantics = [#tpu.dimension_semantics<parallel>, #tpu.dimension_semantics<arbitrary>], iteration_bounds = array<i64: 1, 1>, scalar_prefetch = 0 : i64, scratch_operands = 0 : i64, tpu.core_type = #tpu.core_type<tc>, window_params = [{transform_indices = @transform_0, window_bounds = array<i64: 2, 2048>}, {transform_indices = @transform_1, window_bounds = array<i64: 1, 2048>}, {transform_indices = @transform_2, window_bounds = array<i64: 1, 2048>}, {transform_indices = @transform_3, window_bounds = array<i64: 2, 2048>}]} {
    %c0 = arith.constant 0 : index
    %c0_0 = arith.constant 0 : index
    %0 = vector.load %arg2[%c0, %c0_0] : memref<2x2048xf32, #tpu.memory_space<vmem>>, vector<2x2048xf32>
    %c0_1 = arith.constant 0 : index
    %c0_2 = arith.constant 0 : index
    %1 = vector.load %arg3[%c0_1, %c0_2] : memref<1x2048xf32, #tpu.memory_space<vmem>>, vector<1x2048xf32>
    %c0_3 = arith.constant 0 : index
    %c0_4 = arith.constant 0 : index
    %2 = vector.load %arg4[%c0_3, %c0_4] : memref<1x2048xf32, #tpu.memory_space<vmem>>, vector<1x2048xf32>
    %c2047_i32 = arith.constant 2047 : i32
    %3 = tpu.dynamic_rotate %0 by %c2047_i32 dim 1 : vector<2x2048xf32>, i32 -> vector<2x2048xf32>
    %c1_i32 = arith.constant 1 : i32
    %4 = tpu.dynamic_rotate %0 by %c1_i32 dim 1 : vector<2x2048xf32>, i32 -> vector<2x2048xf32>
    %5 = tpu.iota {dimensions = array<i32: 1>} : vector<2x2048xi32>
    %c1_i32_5 = arith.constant 1 : i32
    %6 = vector.broadcast %c1_i32_5 : i32 to vector<2x2048xi32>
    %7 = arith.andi %5, %6 : vector<2x2048xi32>
    %c0_i32 = arith.constant 0 : i32
    %8 = vector.broadcast %c0_i32 : i32 to vector<2x2048xi32>
    %9 = arith.cmpi eq, %7, %8 : vector<2x2048xi32>
    %cst = arith.constant 0.000000e+00 : f32
    %10 = vector.broadcast %cst : f32 to vector<2x2048xf32>
    %11 = arith.subf %10, %3 : vector<2x2048xf32>
    %12 = arith.select %9, %11, %4 : vector<2x2048xi1>, vector<2x2048xf32>
    %13 = vector.broadcast %1 : vector<1x2048xf32> to vector<2x2048xf32>
    %14 = arith.mulf %0, %13 : vector<2x2048xf32>
    %15 = vector.broadcast %2 : vector<1x2048xf32> to vector<2x2048xf32>
    %16 = arith.mulf %12, %15 : vector<2x2048xf32>
    %17 = arith.addf %14, %16 : vector<2x2048xf32>
    %c0_6 = arith.constant 0 : index
    %c0_7 = arith.constant 0 : index
    %18 = vector.load %arg5[%c0_6, %c0_7] : memref<2x2048xf32, #tpu.memory_space<vmem>>, vector<2x2048xf32>
    tpu.vector_store %arg5[%c0_6, %c0_7], %17 {strides = array<i32>} : memref<2x2048xf32, #tpu.memory_space<vmem>>, vector<2x2048xf32>,
    return
  }
  func.func @transform_0(%arg0: i32, %arg1: i32) -> (i32, i32) {
    %c0_i32 = arith.constant 0 : i32
    return %arg1, %arg0 : i32, i32
  }
  func.func @transform_1(%arg0: i32, %arg1: i32) -> (i32, i32) {
    %c0_i32 = arith.constant 0 : i32
    %c0_i32_0 = arith.constant 0 : i32
    return %c0_i32, %arg0 : i32, i32
  }
  func.func @transform_2(%arg0: i32, %arg1: i32) -> (i32, i32) {
    %c0_i32 = arith.constant 0 : i32
    %c0_i32_0 = arith.constant 0 : i32
    return %c0_i32, %arg0 : i32, i32
  }
  func.func @transform_3(%arg0: i32, %arg1: i32) -> (i32, i32) {
    %c0_i32 = arith.constant 0 : i32
    return %arg1, %arg0 : i32, i32
  }
}

</mosaic_0001>

<llo_original>
// kernel: tpu_custom_call.1
$region0: #{tpu_custom_call.1}
  #allocation0 [shape = 'u32[]', space=smem, size = 0x4, offset = 0x4, fixed_abs, tag = 'smem constant byte address 0x4 - core index']
  #allocation1 [shape = 'u32[144,128]{1,0:T(1,128)}', space=vmem, size = 0x12000, scoped, tag = 'internal scratch']
  %s0 = inlined_call_operand.hbm [shape: f32[2,2048], index: 0, kind: input, shape index: {}]
  %s1 = inlined_call_operand.hbm [shape: f32[1,2048], index: 1, kind: input, shape index: {}]
  %s2 = inlined_call_operand.hbm [shape: f32[1,2048], index: 2, kind: input, shape index: {}]
  %s3 = inlined_call_operand.hbm [shape: f32[2,2048], index: 3, kind: output, shape index: {}]
  %s4 = sld [smem:[#allocation0]]
  $region34: #{tpu_custom_call.1} parent=0
    _
  %s6 = ssub.s32 1, %s4
  %s7 = scalar_select 0, %s6, %s4
  $region1: #{tpu_custom_call.1} parent=0
    #allocation2 [shape = 'u8[16384]{0}', space=vmem, size = 0x4000, scoped, tag = 'input window, operand 0, single buffered']
    #allocation3 [shape = 's32[1]{0}', space=sflag, size = 0x4, scoped, tag = 'scoped memory for tpu_custom_call.1']
    #allocation4 [shape = 's32[1]{0}', space=sflag, size = 0x4, scoped, tag = 'scoped memory for tpu_custom_call.1']
    #allocation5 [shape = 'u8[8192]{0}', space=vmem, size = 0x2000, scoped, tag = 'input window, operand 1, single buffered']
    #allocation6 [shape = 's32[1]{0}', space=sflag, size = 0x4, scoped, tag = 'scoped memory for tpu_custom_call.1']
    #allocation7 [shape = 'u8[8192]{0}', space=vmem, size = 0x2000, scoped, tag = 'input window, operand 2, single buffered']
    #allocation8 [shape = 'u8[16384]{0}', space=vmem, size = 0x4000, scoped, tag = 'output window, operand 0, single buffered']
    %8 = vsyncpa [#allocation3], 0
    %9 = vsyncpa [#allocation6], 0
    %10 = vsyncpa [#allocation4], 0
    // Predicated region
    $region2: #{tpu_custom_call.1} parent=1 // pred_check
      _
    $region3: #{tpu_custom_call.1} parent=1 // pred_check_branch
      %12 = sbr.rel (0) target = $region5
    $region4: #{tpu_custom_call.1} parent=1 // pred_region
      %s14 = ssub.s32 512, 512
      %15 = vsyncadd [#allocation3], %s14
      %s17 = sshll.u32 [#allocation2], 4
      %s18 = int_to_ptr.vmem [resolvable:$true] %s17
      %20 = dma.hbm_to_vmem [thread:$0]  %s0, 512, %s18, [#allocation3]
    $region5: #{tpu_custom_call.1} parent=1 // pred_fallthru
      _
    // Predicated region
    $region6: #{tpu_custom_call.1} parent=1 // pred_check
      _
    $region7: #{tpu_custom_call.1} parent=1 // pred_check_branch
      %22 = sbr.rel (0) target = $region9
    $region8: #{tpu_custom_call.1} parent=1 // pred_region
      %s24 = ssub.s32 256, 256
      %25 = vsyncadd [#allocation6], %s24
      %s27 = sshll.u32 [#allocation5], 4
      %s28 = int_to_ptr.vmem [resolvable:$true] %s27
      %30 = dma.hbm_to_vmem [thread:$0]  %s1, 256, %s28, [#allocation6]
    $region9: #{tpu_custom_call.1} parent=1 // pred_fallthru
      _
    // Predicated region
    $region10: #{tpu_custom_call.1} parent=1 // pred_check
      _
    $region11: #{tpu_custom_call.1} parent=1 // pred_check_branch
      %32 = sbr.rel (0) target = $region13
    $region12: #{tpu_custom_call.1} parent=1 // pred_region
      %s34 = ssub.s32 256, 256
      %35 = vsyncadd [#allocation6], %s34
      %s37 = sshll.u32 [#allocation7], 4
      %s38 = int_to_ptr.vmem [resolvable:$true] %s37
      %40 = dma.hbm_to_vmem [thread:$0]  %s2, 256, %s38, [#allocation6]
    $region13: #{tpu_custom_call.1} parent=1 // pred_fallthru
      _
    // Predicated region
    $region14: #{tpu_custom_call.1} parent=1 // pred_check
      _
    $region15: #{tpu_custom_call.1} parent=1 // pred_check_branch
      %42 = sbr.rel (0) target = $region17
    $region16: #{tpu_custom_call.1} parent=1 // pred_region
      %43 = dma.done [#allocation3], 512
    $region17: #{tpu_custom_call.1} parent=1 // pred_fallthru
      _
    // Predicated region
    $region18: #{tpu_custom_call.1} parent=1 // pred_check
      _
    $region19: #{tpu_custom_call.1} parent=1 // pred_check_branch
      %45 = sbr.rel (0) target = $region21
    $region20: #{tpu_custom_call.1} parent=1 // pred_region
      %46 = dma.done [#allocation6], 256
    $region21: #{tpu_custom_call.1} parent=1 // pred_fallthru
      _
    // Predicated region
    $region22: #{tpu_custom_call.1} parent=1 // pred_check
      _
    $region23: #{tpu_custom_call.1} parent=1 // pred_check_branch
      %48 = sbr.rel (0) target = $region25
    $region24: #{tpu_custom_call.1} parent=1 // pred_region
      %49 = dma.done [#allocation6], 256
    $region25: #{tpu_custom_call.1} parent=1 // pred_fallthru
      _
    %v50 = vld [vmem:[#allocation2] sm:$0xff]
    %v51 = vld [vmem:[#allocation2 + $0x8] sm:$0xff]
    %v52 = vld [vmem:[#allocation2 + $0x10] sm:$0xff]
    %v53 = vld [vmem:[#allocation2 + $0x18] sm:$0xff]
    %v54 = vld [vmem:[#allocation5] sm:$0xff]
    %v55 = vld [vmem:[#allocation5 + $0x8] sm:$0xff]
    %v56 = vld [vmem:[#allocation7] sm:$0xff]
    %v57 = vld [vmem:[#allocation7 + $0x8] sm:$0xff]
    %v62 = vcombine.high %v50, %v50
    %v64 = vunpack.c.l.s4 1983009808
    %v65 = vunpack.c.0.s8 %v64
    %v66 = vlaneseq
    %v67 = vshrl.u32 %v66, 7
    %v68 = vsub.s32 %v65, %v67
    %v69 = vrot.slane %v50, %v68
    %v71 = vunpack.c.l.s4 1983009808
    %v72 = vunpack.c.0.s8 %v71
    %v73 = vlaneseq
    %v74 = vshrl.u32 %v73, 7
    %v75 = vsub.s32 %v72, %v74
    %v76 = vrot.slane %v62, %v75
    %v77 = vcombine.high %v69, %v69
    %v78 = vcombine.high %v76, %v76
    %v79 = vcombine.high %v51, %v51
    %v81 = vunpack.c.l.s4 1983009808
    %v82 = vunpack.c.0.s8 %v81
    %v83 = vlaneseq
    %v84 = vshrl.u32 %v83, 7
    %v85 = vsub.s32 %v82, %v84
    %v86 = vrot.slane %v51, %v85
    %v88 = vunpack.c.l.s4 1983009808
    %v89 = vunpack.c.0.s8 %v88
    %v90 = vlaneseq
    %v91 = vshrl.u32 %v90, 7
    %v92 = vsub.s32 %v89, %v91
    %v93 = vrot.slane %v79, %v92
    %v94 = vcombine.high %v86, %v86
    %v95 = vcombine.high %v93, %v93
    %v96 = vcombine.high %v52, %v52
    %v98 = vunpack.c.l.s4 1983009808
    %v99 = vunpack.c.0.s8 %v98
    %v100 = vlaneseq
    %v101 = vshrl.u32 %v100, 7
    %v102 = vsub.s32 %v99, %v101
    %v103 = vrot.slane %v52, %v102
    %v105 = vunpack.c.l.s4 1983009808
    %v106 = vunpack.c.0.s8 %v105
    %v107 = vlaneseq
    %v108 = vshrl.u32 %v107, 7
    %v109 = vsub.s32 %v106, %v108
    %v110 = vrot.slane %v96, %v109
    %v111 = vcombine.high %v103, %v103
    %v112 = vcombine.high %v110, %v110
    %v113 = vcombine.high %v53, %v53
    %v115 = vunpack.c.l.s4 1983009808
    %v116 = vunpack.c.0.s8 %v115
    %v117 = vlaneseq
    %v118 = vshrl.u32 %v117, 7
    %v119 = vsub.s32 %v116, %v118
    %v120 = vrot.slane %v53, %v119
    %v122 = vunpack.c.l.s4 1983009808
    %v123 = vunpack.c.0.s8 %v122
    %v124 = vlaneseq
    %v125 = vshrl.u32 %v124, 7
    %v126 = vsub.s32 %v123, %v125
    %v127 = vrot.slane %v113, %v126
    %v128 = vcombine.high %v120, %v120
    %v129 = vcombine.high %v127, %v127
    %146 = vrot.lane.b32.xlu0 %v69, 127
    %v147 = vpop.permute.xlu0 %146
    %148 = vrot.lane.b32.xlu0 %v77, 127
    %v149 = vpop.permute.xlu0 %148
    %150 = vrot.lane.b32.xlu0 %v76, 127
    %v151 = vpop.permute.xlu0 %150
    %152 = vrot.lane.b32.xlu0 %v78, 127
    %v153 = vpop.permute.xlu0 %152
    %154 = vrot.lane.b32.xlu0 %v86, 127
    %v155 = vpop.permute.xlu0 %154
    %156 = vrot.lane.b32.xlu0 %v94, 127
    %v157 = vpop.permute.xlu0 %156
    %158 = vrot.lane.b32.xlu0 %v93, 127
    %v159 = vpop.permute.xlu0 %158
    %160 = vrot.lane.b32.xlu0 %v95, 127
    %v161 = vpop.permute.xlu0 %160
    %162 = vrot.lane.b32.xlu0 %v103, 127
    %v163 = vpop.permute.xlu0 %162
    %164 = vrot.lane.b32.xlu0 %v111, 127
    %v165 = vpop.permute.xlu0 %164
    %166 = vrot.lane.b32.xlu0 %v110, 127
    %v167 = vpop.permute.xlu0 %166
    %168 = vrot.lane.b32.xlu0 %v112, 127
    %v169 = vpop.permute.xlu0 %168
    %170 = vrot.lane.b32.xlu0 %v120, 127
    %v171 = vpop.permute.xlu0 %170
    %172 = vrot.lane.b32.xlu0 %v128, 127
    %v173 = vpop.permute.xlu0 %172
    %174 = vrot.lane.b32.xlu0 %v127, 127
    %v175 = vpop.permute.xlu0 %174
    %176 = vrot.lane.b32.xlu0 %v129, 127
    %v177 = vpop.permute.xlu0 %176
    %v178 = vlaneseq
    %v179 = vand.u32 %v178, 127
    %vm180 = vcmp.lt.s32.totalorder %v179, 127
    %v181 = vsel %vm180, %v175, %v177
    %v182 = vsel %vm180, %v173, %v175
    %v183 = vsel %vm180, %v171, %v173
    %v184 = vsel %vm180, %v169, %v171
    %v185 = vsel %vm180, %v167, %v169
    %v186 = vsel %vm180, %v165, %v167
    %v187 = vsel %vm180, %v163, %v165
    %v188 = vsel %vm180, %v161, %v163
    %v189 = vsel %vm180, %v159, %v161
    %v190 = vsel %vm180, %v157, %v159
    %v191 = vsel %vm180, %v155, %v157
    %v192 = vsel %vm180, %v153, %v155
    %v193 = vsel %vm180, %v151, %v153
    %v194 = vsel %vm180, %v149, %v151
    %v195 = vsel %vm180, %v147, %v149
    %v196 = vsel %vm180, %v177, %v147
    %197 = vrot.lane.b32.xlu0 %v69, 1
    %v198 = vpop.permute.xlu0 %197
    %199 = vrot.lane.b32.xlu0 %v77, 1
    %v200 = vpop.permute.xlu0 %199
    %201 = vrot.lane.b32.xlu0 %v76, 1
    %v202 = vpop.permute.xlu0 %201
    %203 = vrot.lane.b32.xlu0 %v78, 1
    %v204 = vpop.permute.xlu0 %203
    %205 = vrot.lane.b32.xlu0 %v86, 1
    %v206 = vpop.permute.xlu0 %205
    %207 = vrot.lane.b32.xlu0 %v94, 1
    %v208 = vpop.permute.xlu0 %207
    %209 = vrot.lane.b32.xlu0 %v93, 1
    %v210 = vpop.permute.xlu0 %209
    %211 = vrot.lane.b32.xlu0 %v95, 1
    %v212 = vpop.permute.xlu0 %211
    %213 = vrot.lane.b32.xlu0 %v103, 1
    %v214 = vpop.permute.xlu0 %213
    %215 = vrot.lane.b32.xlu0 %v111, 1
    %v216 = vpop.permute.xlu0 %215
    %217 = vrot.lane.b32.xlu0 %v110, 1
    %v218 = vpop.permute.xlu0 %217
    %219 = vrot.lane.b32.xlu0 %v112, 1
    %v220 = vpop.permute.xlu0 %219
    %221 = vrot.lane.b32.xlu0 %v120, 1
    %v222 = vpop.permute.xlu0 %221
    %223 = vrot.lane.b32.xlu0 %v128, 1
    %v224 = vpop.permute.xlu0 %223
    %225 = vrot.lane.b32.xlu0 %v127, 1
    %v226 = vpop.permute.xlu0 %225
    %227 = vrot.lane.b32.xlu0 %v129, 1
    %v228 = vpop.permute.xlu0 %227
    %vm229 = vcmp.lt.s32.totalorder %v179, 1
    %v230 = vsel %vm229, %v226, %v228
    %v231 = vsel %vm229, %v224, %v226
    %v232 = vsel %vm229, %v222, %v224
    %v233 = vsel %vm229, %v220, %v222
    %v234 = vsel %vm229, %v218, %v220
    %v235 = vsel %vm229, %v216, %v218
    %v236 = vsel %vm229, %v214, %v216
    %v237 = vsel %vm229, %v212, %v214
    %v238 = vsel %vm229, %v210, %v212
    %v239 = vsel %vm229, %v208, %v210
    %v240 = vsel %vm229, %v206, %v208
    %v241 = vsel %vm229, %v204, %v206
    %v242 = vsel %vm229, %v202, %v204
    %v243 = vsel %vm229, %v200, %v202
    %v244 = vsel %vm229, %v198, %v200
    %v245 = vsel %vm229, %v228, %v198
    %v246 = vadd.s32 %v179, 128
    %v247 = vadd.s32 %v179, 256
    %v248 = vadd.s32 %v179, 384
    %v249 = vadd.s32 %v179, 512
    %v250 = vadd.s32 %v179, 640
    %v251 = vadd.s32 %v179, 768
    %v252 = vadd.s32 %v179, 896
    %v253 = vadd.s32 %v179, 1024
    %v254 = vadd.s32 %v179, 1152
    %v255 = vadd.s32 %v179, 1280
    %v256 = vadd.s32 %v179, 1408
    %v257 = vadd.s32 %v179, 1536
    %v258 = vadd.s32 %v179, 1664
    %v259 = vadd.s32 %v179, 1792
    %v260 = vadd.s32 %v179, 1920
    %v261 = vand.u32 %v179, 1
    %v262 = vand.u32 %v246, 1
    %v263 = vand.u32 %v247, 1
    %v264 = vand.u32 %v248, 1
    %v265 = vand.u32 %v249, 1
    %v266 = vand.u32 %v250, 1
    %v267 = vand.u32 %v251, 1
    %v268 = vand.u32 %v252, 1
    %v269 = vand.u32 %v253, 1
    %v270 = vand.u32 %v254, 1
    %v271 = vand.u32 %v255, 1
    %v272 = vand.u32 %v256, 1
    %v273 = vand.u32 %v257, 1
    %v274 = vand.u32 %v258, 1
    %v275 = vand.u32 %v259, 1
    %v276 = vand.u32 %v260, 1
    %vm277 = vcmp.eq.s32.totalorder %v261, 0
    %vm278 = vcmp.eq.s32.totalorder %v262, 0
    %vm279 = vcmp.eq.s32.totalorder %v263, 0
    %vm280 = vcmp.eq.s32.totalorder %v264, 0
    %vm281 = vcmp.eq.s32.totalorder %v265, 0
    %vm282 = vcmp.eq.s32.totalorder %v266, 0
    %vm283 = vcmp.eq.s32.totalorder %v267, 0
    %vm284 = vcmp.eq.s32.totalorder %v268, 0
    %vm285 = vcmp.eq.s32.totalorder %v269, 0
    %vm286 = vcmp.eq.s32.totalorder %v270, 0
    %vm287 = vcmp.eq.s32.totalorder %v271, 0
    %vm288 = vcmp.eq.s32.totalorder %v272, 0
    %vm289 = vcmp.eq.s32.totalorder %v273, 0
    %vm290 = vcmp.eq.s32.totalorder %v274, 0
    %vm291 = vcmp.eq.s32.totalorder %v275, 0
    %vm292 = vcmp.eq.s32.totalorder %v276, 0
    %v293 = vsub.f32 0.0, %v195
    %v294 = vsub.f32 0.0, %v194
    %v295 = vsub.f32 0.0, %v193
    %v296 = vsub.f32 0.0, %v192
    %v297 = vsub.f32 0.0, %v191
    %v298 = vsub.f32 0.0, %v190
    %v299 = vsub.f32 0.0, %v189
    %v300 = vsub.f32 0.0, %v188
    %v301 = vsub.f32 0.0, %v187
    %v302 = vsub.f32 0.0, %v186
    %v303 = vsub.f32 0.0, %v185
    %v304 = vsub.f32 0.0, %v184
    %v305 = vsub.f32 0.0, %v183
    %v306 = vsub.f32 0.0, %v182
    %v307 = vsub.f32 0.0, %v181
    %v308 = vsub.f32 0.0, %v196
    %v309 = vsel %vm277, %v293, %v245
    %v310 = vsel %vm278, %v294, %v244
    %v311 = vsel %vm279, %v295, %v243
    %v312 = vsel %vm280, %v296, %v242
    %v313 = vsel %vm281, %v297, %v241
    %v314 = vsel %vm282, %v298, %v240
    %v315 = vsel %vm283, %v299, %v239
    %v316 = vsel %vm284, %v300, %v238
    %v317 = vsel %vm285, %v301, %v237
    %v318 = vsel %vm286, %v302, %v236
    %v319 = vsel %vm287, %v303, %v235
    %v320 = vsel %vm288, %v304, %v234
    %v321 = vsel %vm289, %v305, %v233
    %v322 = vsel %vm290, %v306, %v232
    %v323 = vsel %vm291, %v307, %v231
    %v324 = vsel %vm292, %v308, %v230
    %v327 = vlaneseq
    %v328 = vshrl.u32 %v327, 7
    %v329 = vsub.s32 0, %v328
    %v330 = vrot.slane %v54, %v329
    %v331 = vlaneseq
    %v332 = vshrl.u32 %v331, 7
    %v333 = vsub.s32 1, %v332
    %v334 = vrot.slane %v54, %v333
    %v335 = vlaneseq
    %v336 = vshrl.u32 %v335, 7
    %v337 = vsub.s32 2, %v336
    %v338 = vrot.slane %v54, %v337
    %v339 = vlaneseq
    %v340 = vshrl.u32 %v339, 7
    %v341 = vsub.s32 3, %v340
    %v342 = vrot.slane %v54, %v341
    %v343 = vlaneseq
    %v344 = vshrl.u32 %v343, 7
    %v345 = vsub.s32 4, %v344
    %v346 = vrot.slane %v54, %v345
    %v347 = vlaneseq
    %v348 = vshrl.u32 %v347, 7
    %v349 = vsub.s32 5, %v348
    %v350 = vrot.slane %v54, %v349
    %v351 = vlaneseq
    %v352 = vshrl.u32 %v351, 7
    %v353 = vsub.s32 6, %v352
    %v354 = vrot.slane %v54, %v353
    %v355 = vlaneseq
    %v356 = vshrl.u32 %v355, 7
    %v357 = vsub.s32 7, %v356
    %v358 = vrot.slane %v54, %v357
    %v359 = vlaneseq
    %v360 = vshrl.u32 %v359, 7
    %v361 = vsub.s32 0, %v360
    %v362 = vrot.slane %v55, %v361
    %v363 = vlaneseq
    %v364 = vshrl.u32 %v363, 7
    %v365 = vsub.s32 1, %v364
    %v366 = vrot.slane %v55, %v365
    %v367 = vlaneseq
    %v368 = vshrl.u32 %v367, 7
    %v369 = vsub.s32 2, %v368
    %v370 = vrot.slane %v55, %v369
    %v371 = vlaneseq
    %v372 = vshrl.u32 %v371, 7
    %v373 = vsub.s32 3, %v372
    %v374 = vrot.slane %v55, %v373
    %v375 = vlaneseq
    %v376 = vshrl.u32 %v375, 7
    %v377 = vsub.s32 4, %v376
    %v378 = vrot.slane %v55, %v377
    %v379 = vlaneseq
    %v380 = vshrl.u32 %v379, 7
    %v381 = vsub.s32 5, %v380
    %v382 = vrot.slane %v55, %v381
    %v383 = vlaneseq
    %v384 = vshrl.u32 %v383, 7
    %v385 = vsub.s32 6, %v384
    %v386 = vrot.slane %v55, %v385
    %v387 = vlaneseq
    %v388 = vshrl.u32 %v387, 7
    %v389 = vsub.s32 7, %v388
    %v390 = vrot.slane %v55, %v389
    %v391 = vcombine.low %v330, %v334
    %v392 = vcombine.low %v338, %v342
    %v394 = vunpack.c.l.s4 1983009808
    %v395 = vunpack.c.0.s8 %v394
    %v396 = vlaneseq
    %v397 = vshrl.u32 %v396, 7
    %v398 = vsub.s32 %v395, %v397
    %v399 = vrot.slane %v391, %v398
    %v401 = vunpack.c.l.s4 1983009808
    %v402 = vunpack.c.0.s8 %v401
    %v403 = vlaneseq
    %v404 = vshrl.u32 %v403, 7
    %v405 = vsub.s32 %v402, %v404
    %v406 = vrot.slane %v392, %v405
    %v407 = vcombine.low %v399, %v406
    %v408 = vcombine.low %v346, %v350
    %v409 = vcombine.low %v354, %v358
    %v411 = vunpack.c.l.s4 1983009808
    %v412 = vunpack.c.0.s8 %v411
    %v413 = vlaneseq
    %v414 = vshrl.u32 %v413, 7
    %v415 = vsub.s32 %v412, %v414
    %v416 = vrot.slane %v408, %v415
    %v418 = vunpack.c.l.s4 1983009808
    %v419 = vunpack.c.0.s8 %v418
    %v420 = vlaneseq
    %v421 = vshrl.u32 %v420, 7
    %v422 = vsub.s32 %v419, %v421
    %v423 = vrot.slane %v409, %v422
    %v424 = vcombine.low %v416, %v423
    %v425 = vcombine.low %v362, %v366
    %v426 = vcombine.low %v370, %v374
    %v428 = vunpack.c.l.s4 1983009808
    %v429 = vunpack.c.0.s8 %v428
    %v430 = vlaneseq
    %v431 = vshrl.u32 %v430, 7
    %v432 = vsub.s32 %v429, %v431
    %v433 = vrot.slane %v425, %v432
    %v435 = vunpack.c.l.s4 1983009808
    %v436 = vunpack.c.0.s8 %v435
    %v437 = vlaneseq
    %v438 = vshrl.u32 %v437, 7
    %v439 = vsub.s32 %v436, %v438
    %v440 = vrot.slane %v426, %v439
    %v441 = vcombine.low %v433, %v440
    %v442 = vcombine.low %v378, %v382
    %v443 = vcombine.low %v386, %v390
    %v445 = vunpack.c.l.s4 1983009808
    %v446 = vunpack.c.0.s8 %v445
    %v447 = vlaneseq
    %v448 = vshrl.u32 %v447, 7
    %v449 = vsub.s32 %v446, %v448
    %v450 = vrot.slane %v442, %v449
    %v452 = vunpack.c.l.s4 1983009808
    %v453 = vunpack.c.0.s8 %v452
    %v454 = vlaneseq
    %v455 = vshrl.u32 %v454, 7
    %v456 = vsub.s32 %v453, %v455
    %v457 = vrot.slane %v443, %v456
    %v458 = vcombine.low %v450, %v457
    %v463 = vmul.f32 %v50, %v407
    %v464 = vmul.f32 %v51, %v424
    %v465 = vmul.f32 %v52, %v441
    %v466 = vmul.f32 %v53, %v458
    %v469 = vlaneseq
    %v470 = vshrl.u32 %v469, 7
    %v471 = vsub.s32 0, %v470
    %v472 = vrot.slane %v56, %v471
    %v473 = vlaneseq
    %v474 = vshrl.u32 %v473, 7
    %v475 = vsub.s32 1, %v474
    %v476 = vrot.slane %v56, %v475
    %v477 = vlaneseq
    %v478 = vshrl.u32 %v477, 7
    %v479 = vsub.s32 2, %v478
    %v480 = vrot.slane %v56, %v479
    %v481 = vlaneseq
    %v482 = vshrl.u32 %v481, 7
    %v483 = vsub.s32 3, %v482
    %v484 = vrot.slane %v56, %v483
    %v485 = vlaneseq
    %v486 = vshrl.u32 %v485, 7
    %v487 = vsub.s32 4, %v486
    %v488 = vrot.slane %v56, %v487
    %v489 = vlaneseq
    %v490 = vshrl.u32 %v489, 7
    %v491 = vsub.s32 5, %v490
    %v492 = vrot.slane %v56, %v491
    %v493 = vlaneseq
    %v494 = vshrl.u32 %v493, 7
    %v495 = vsub.s32 6, %v494
    %v496 = vrot.slane %v56, %v495
    %v497 = vlaneseq
    %v498 = vshrl.u32 %v497, 7
    %v499 = vsub.s32 7, %v498
    %v500 = vrot.slane %v56, %v499
    %v501 = vlaneseq
    %v502 = vshrl.u32 %v501, 7
    %v503 = vsub.s32 0, %v502
    %v504 = vrot.slane %v57, %v503
    %v505 = vlaneseq
    %v506 = vshrl.u32 %v505, 7
    %v507 = vsub.s32 1, %v506
    %v508 = vrot.slane %v57, %v507
    %v509 = vlaneseq
    %v510 = vshrl.u32 %v509, 7
    %v511 = vsub.s32 2, %v510
    %v512 = vrot.slane %v57, %v511
    %v513 = vlaneseq
    %v514 = vshrl.u32 %v513, 7
    %v515 = vsub.s32 3, %v514
    %v516 = vrot.slane %v57, %v515
    %v517 = vlaneseq
    %v518 = vshrl.u32 %v517, 7
    %v519 = vsub.s32 4, %v518
    %v520 = vrot.slane %v57, %v519
    %v521 = vlaneseq
    %v522 = vshrl.u32 %v521, 7
    %v523 = vsub.s32 5, %v522
    %v524 = vrot.slane %v57, %v523
    %v525 = vlaneseq
    %v526 = vshrl.u32 %v525, 7
    %v527 = vsub.s32 6, %v526
    %v528 = vrot.slane %v57, %v527
    %v529 = vlaneseq
    %v530 = vshrl.u32 %v529, 7
    %v531 = vsub.s32 7, %v530
    %v532 = vrot.slane %v57, %v531
    %v549 = vmul.f32 %v309, %v472
    %v550 = vmul.f32 %v310, %v476
    %v551 = vmul.f32 %v311, %v480
    %v552 = vmul.f32 %v312, %v484
    %v553 = vmul.f32 %v313, %v488
    %v554 = vmul.f32 %v314, %v492
    %v555 = vmul.f32 %v315, %v496
    %v556 = vmul.f32 %v316, %v500
    %v557 = vmul.f32 %v317, %v504
    %v558 = vmul.f32 %v318, %v508
    %v559 = vmul.f32 %v319, %v512
    %v560 = vmul.f32 %v320, %v516
    %v561 = vmul.f32 %v321, %v520
    %v562 = vmul.f32 %v322, %v524
    %v563 = vmul.f32 %v323, %v528
    %v564 = vmul.f32 %v324, %v532
    %v581 = vcombine.low %v549, %v550
    %v582 = vcombine.low %v551, %v552
    %v584 = vunpack.c.l.s4 1983009808
    %v585 = vunpack.c.0.s8 %v584
    %v586 = vlaneseq
    %v587 = vshrl.u32 %v586, 7
    %v588 = vsub.s32 %v585, %v587
    %v589 = vrot.slane %v581, %v588
    %v591 = vunpack.c.l.s4 1983009808
    %v592 = vunpack.c.0.s8 %v591
    %v593 = vlaneseq
    %v594 = vshrl.u32 %v593, 7
    %v595 = vsub.s32 %v592, %v594
    %v596 = vrot.slane %v582, %v595
    %v597 = vcombine.low %v589, %v596
    %v598 = vcombine.low %v553, %v554
    %v599 = vcombine.low %v555, %v556
    %v601 = vunpack.c.l.s4 1983009808
    %v602 = vunpack.c.0.s8 %v601
    %v603 = vlaneseq
    %v604 = vshrl.u32 %v603, 7
    %v605 = vsub.s32 %v602, %v604
    %v606 = vrot.slane %v598, %v605
    %v608 = vunpack.c.l.s4 1983009808
    %v609 = vunpack.c.0.s8 %v608
    %v610 = vlaneseq
    %v611 = vshrl.u32 %v610, 7
    %v612 = vsub.s32 %v609, %v611
    %v613 = vrot.slane %v599, %v612
    %v614 = vcombine.low %v606, %v613
    %v615 = vcombine.low %v557, %v558
    %v616 = vcombine.low %v559, %v560
    %v618 = vunpack.c.l.s4 1983009808
    %v619 = vunpack.c.0.s8 %v618
    %v620 = vlaneseq
    %v621 = vshrl.u32 %v620, 7
    %v622 = vsub.s32 %v619, %v621
    %v623 = vrot.slane %v615, %v622
    %v625 = vunpack.c.l.s4 1983009808
    %v626 = vunpack.c.0.s8 %v625
    %v627 = vlaneseq
    %v628 = vshrl.u32 %v627, 7
    %v629 = vsub.s32 %v626, %v628
    %v630 = vrot.slane %v616, %v629
    %v631 = vcombine.low %v623, %v630
    %v632 = vcombine.low %v561, %v562
    %v633 = vcombine.low %v563, %v564
    %v635 = vunpack.c.l.s4 1983009808
    %v636 = vunpack.c.0.s8 %v635
    %v637 = vlaneseq
    %v638 = vshrl.u32 %v637, 7
    %v639 = vsub.s32 %v636, %v638
    %v640 = vrot.slane %v632, %v639
    %v642 = vunpack.c.l.s4 1983009808
    %v643 = vunpack.c.0.s8 %v642
    %v644 = vlaneseq
    %v645 = vshrl.u32 %v644, 7
    %v646 = vsub.s32 %v643, %v645
    %v647 = vrot.slane %v633, %v646
    %v648 = vcombine.low %v640, %v647
    %v653 = vadd.f32 %v463, %v597
    %v654 = vadd.f32 %v464, %v614
    %v655 = vadd.f32 %v465, %v631
    %v656 = vadd.f32 %v466, %v648
    %657 = vst [vmem:[#allocation8] sm:$0xff] %v653
    %658 = vst [vmem:[#allocation8 + $0x8] sm:$0xff] %v654
    %659 = vst [vmem:[#allocation8 + $0x10] sm:$0xff] %v655
    %660 = vst [vmem:[#allocation8 + $0x18] sm:$0xff] %v656
    // Predicated region
    $region26: #{tpu_custom_call.1} parent=1 // pred_check
      _
    $region27: #{tpu_custom_call.1} parent=1 // pred_check_branch
      %662 = sbr.rel (0) target = $region29
    $region28: #{tpu_custom_call.1} parent=1 // pred_region
      %s664 = ssub.s32 512, 512
      %665 = vsyncadd [#allocation4], %s664
      %s667 = sshll.u32 [#allocation8], 4
      %s668 = int_to_ptr.vmem [resolvable:$true] %s667
      %670 = dma.vmem_to_hbm [thread:$0]  %s668, 512, %s3, [#allocation4]
    $region29: #{tpu_custom_call.1} parent=1 // pred_fallthru
      _
    // Predicated region
    $region30: #{tpu_custom_call.1} parent=1 // pred_check
      _
    $region31: #{tpu_custom_call.1} parent=1 // pred_check_branch
      %672 = sbr.rel (0) target = $region33
    $region32: #{tpu_custom_call.1} parent=1 // pred_region
      %673 = dma.done [#allocation4], 512
    $region33: #{tpu_custom_call.1} parent=1 // pred_fallthru
      _
    %674 = vsyncpa [#allocation3], 1
    %675 = vsyncpa [#allocation6], 1
    %676 = vsyncpa [#allocation4], 1

</llo_original>
